<compile_context>
chip_gen: v5e
topology: v5e:2x2
jax: 0.10.0
libtpu: 0.0.40
codegen_flags: <defaults>
</compile_context>

<pallas_src>
import jax
import jax.numpy as jnp
from jax.experimental import pallas as pl
from jax.experimental.pallas import tpu as pltpu


def _round_up(x, m):
    return ((x + m - 1) // m) * m


def _vmem_limit_bytes():
    """Generation-aware VMEM limit: physical minus headroom, capped at 96 MiB."""
    try:
        phys = pltpu.get_tpu_info().vmem_capacity_bytes
    except Exception:
        phys = 64 << 20  # conservative (v7x-class) fallback
    limit = min(phys - (16 << 20), 96 << 20)
    return max(limit, 32 << 20)


def _nvdm_ctr_kernel(x_ref, w_ref, bias_ref, o_ref):
    # x_ref:    [tm, K]   (batch tile, full reduction)
    # w_ref:    [K,  tn]  (pre-transposed weight tile, lane-dense on W)
    # bias_ref: [1,  tn]
    # o_ref:    [tm, tn]
    out = jnp.dot(x_ref[...], w_ref[...], preferred_element_type=jnp.float32)
    o_ref[...] = (out + bias_ref[...]).astype(o_ref.dtype)


def nvdm_ctr_forward(x, emb_weight_kw, bias, *, tm=None, tn=None):
    """nvdm_ctr forward: out = x @ emb_weight_kw + bias.

    Args:
      x:             [batch, topic_num]
      emb_weight_kw: [topic_num, word_size] -- the nn.Embedding weight stored
                     pre-transposed (topic-major) at parameter level.
      bias:          [word_size]
    """
    B, K = x.shape
    K2, W = emb_weight_kw.shape
    assert K == K2, "topic_num mismatch between input and embedding weight"
    assert bias.shape == (W,)

    x_isz = jnp.dtype(x.dtype).itemsize
    w_isz = jnp.dtype(emb_weight_kw.dtype).itemsize
    b_isz = jnp.dtype(bias.dtype).itemsize
    o_isz = jnp.dtype(x.dtype).itemsize

    vmem_limit = _vmem_limit_bytes()
    buf_budget = int(vmem_limit * 0.75)       # leave room for Mosaic scratch
    weight_tile_cap = 12 << 20                # per-tile weight bytes

    # Batch tile: cover the whole batch so the weight streams from HBM exactly
    # once; back off (halving, multiple of 8) only if x plus a minimal 128-wide
    # output column block cannot fit the VMEM budget.
    if tm is None:
        tm = B
        while tm > 8:
            x_bytes = 2 * tm * K * x_isz
            per_tn = 2 * (K * w_isz + tm * o_isz + b_isz)
            if x_bytes + 128 * per_tn <= buf_budget:
                break
            tm = max(8, _round_up(tm // 2, 8))

    # Vocab tile: as large as the VMEM budget / weight-tile cap allow,
    # lane-dense (multiple of 128).
    if tn is None:
        eff_tm = min(tm, B)
        x_bytes = 2 * eff_tm * K * x_isz
        per_tn = 2 * (K * w_isz + eff_tm * o_isz + b_isz)
        tn_by_vmem = max(128, (buf_budget - x_bytes) // max(per_tn, 1))
        tn_by_cap = max(128, weight_tile_cap // max(K * w_isz, 1))
        tn = max(128, min(tn_by_vmem, tn_by_cap) // 128 * 128)
        if W <= 128:
            tn = W                                   # full last dim -> legal block
        else:
            tn = min(tn, _round_up(W, 128))
            # Keep >= 2 grid steps so both v7x TensorCores get work.
            if pl.cdiv(B, tm) * pl.cdiv(W, tn) < 2:
                tn = min(tn, _round_up(pl.cdiv(W, 2), 128))

    grid = (pl.cdiv(B, tm), pl.cdiv(W, tn))
    n_i, n_j = grid
    bias2d = bias.reshape(1, W)

    cost = pl.CostEstimate(
        flops=2 * B * K * W,
        transcendentals=0,
        bytes_accessed=(n_i * W * K * w_isz       # weight re-streamed per batch tile
                        + n_j * B * K * x_isz     # x re-streamed per vocab tile
                        + n_i * W * b_isz
                        + B * W * o_isz),
    )

    return pl.pallas_call(
        _nvdm_ctr_kernel,
        out_shape=jax.ShapeDtypeStruct((B, W), x.dtype),
        grid_spec=pltpu.PrefetchScalarGridSpec(
            num_scalar_prefetch=0,
            grid=grid,
            in_specs=[
                pl.BlockSpec((tm, K), lambda i, j: (i, 0)),   # x tile (full K)
                pl.BlockSpec((K, tn), lambda i, j: (0, j)),   # weight tile, [K, W] layout
                pl.BlockSpec((1, tn), lambda i, j: (0, j)),   # bias tile
            ],
            out_specs=pl.BlockSpec((tm, tn), lambda i, j: (i, j)),
        ),
        compiler_params=pltpu.CompilerParams(
            dimension_semantics=("parallel", "parallel"),
            vmem_limit_bytes=vmem_limit,
        ),
        cost_estimate=cost,
    )(x, emb_weight_kw, bias2d)


if __name__ == "__main__":
    # Small shapes consistent with the module: word_size (vocab), topic_num, batch.
    batch = 8
    topic_num = 128
    word_size = 256

    key = jax.random.PRNGKey(0)
    k_emb, k_x = jax.random.split(key)

    # Deterministic parameter init (nn.Embedding default ~ N(0,1); bias = zeros).
    emb_weight = jax.random.normal(k_emb, (word_size, topic_num), dtype=jnp.float32)
    bias = jnp.zeros((word_size,), dtype=jnp.float32)

    # One-time parameter-level transpose to topic-major ([K, W]) layout.
    emb_weight_kw = jnp.asarray(emb_weight.T)

    # Input: [batch, topic_num] (topic-proportion vectors).
    x = jax.random.normal(k_x, (batch, topic_num), dtype=jnp.float32)

    out = nvdm_ctr_forward(x, emb_weight_kw, bias)
    out = jax.block_until_ready(out)

    # Reference check (plain JAX) against the original PyTorch semantics.
    ref = x @ emb_weight.T + bias[None, :]
    assert out.shape == (batch, word_size)
    assert jnp.allclose(out, ref, atol=1e-4, rtol=1e-4)

    print("KERNEL_OK")
</pallas_src>

<mosaic_0001>
module attributes {stable_mosaic.version = 11 : i64} {
  func.func @_nvdm_ctr_kernel(%arg0: i32, %arg1: i32, %arg2: memref<8x128xf32, #tpu.memory_space<vmem>>, %arg3: memref<128x128xf32, #tpu.memory_space<vmem>>, %arg4: memref<1x128xf32, #tpu.memory_space<vmem>>, %arg5: memref<8x128xf32, #tpu.memory_space<vmem>>) attributes {dimension_semantics = [#tpu.dimension_semantics<parallel>, #tpu.dimension_semantics<parallel>], iteration_bounds = array<i64: 1, 2>, scalar_prefetch = 0 : i64, scratch_operands = 0 : i64, tpu.core_type = #tpu.core_type<tc>, window_params = [{transform_indices = @transform_0, window_bounds = array<i64: 8, 128>}, {transform_indices = @transform_1, window_bounds = array<i64: 128, 128>}, {transform_indices = @transform_2, window_bounds = array<i64: 1, 128>}, {transform_indices = @transform_3, window_bounds = array<i64: 8, 128>}]} {
    %c0 = arith.constant 0 : index
    %c0_0 = arith.constant 0 : index
    %0 = vector.load %arg2[%c0, %c0_0] : memref<8x128xf32, #tpu.memory_space<vmem>>, vector<8x128xf32>
    %c0_1 = arith.constant 0 : index
    %c0_2 = arith.constant 0 : index
    %1 = vector.load %arg3[%c0_1, %c0_2] : memref<128x128xf32, #tpu.memory_space<vmem>>, vector<128x128xf32>
    %cst = arith.constant dense<0.000000e+00> : vector<8x128xf32>
    %2 = tpu.matmul %0, %1, %cst {dimension_numbers = #tpu.dot_dimension_numbers<[1], [0], [0], [1], [0, 0, 1, 1], [], []>} : vector<8x128xf32>, vector<128x128xf32>, vector<8x128xf32> -> vector<8x128xf32>
    %c0_3 = arith.constant 0 : index
    %c0_4 = arith.constant 0 : index
    %3 = vector.load %arg4[%c0_3, %c0_4] : memref<1x128xf32, #tpu.memory_space<vmem>>, vector<1x128xf32>
    %4 = vector.broadcast %3 : vector<1x128xf32> to vector<8x128xf32>
    %5 = arith.addf %2, %4 : vector<8x128xf32>
    %c0_5 = arith.constant 0 : index
    %c0_6 = arith.constant 0 : index
    %6 = vector.load %arg5[%c0_5, %c0_6] : memref<8x128xf32, #tpu.memory_space<vmem>>, vector<8x128xf32>
    tpu.vector_store %arg5[%c0_5, %c0_6], %5 {strides = array<i32>} : memref<8x128xf32, #tpu.memory_space<vmem>>, vector<8x128xf32>,
    return
  }
  func.func @transform_0(%arg0: i32, %arg1: i32) -> (i32, i32) {
    %c0_i32 = arith.constant 0 : i32
    %c0_i32_0 = arith.constant 0 : i32
    return %arg0, %c0_i32 : i32, i32
  }
  func.func @transform_1(%arg0: i32, %arg1: i32) -> (i32, i32) {
    %c0_i32 = arith.constant 0 : i32
    %c0_i32_0 = arith.constant 0 : i32
    return %c0_i32, %arg1 : i32, i32
  }
  func.func @transform_2(%arg0: i32, %arg1: i32) -> (i32, i32) {
    %c0_i32 = arith.constant 0 : i32
    %c0_i32_0 = arith.constant 0 : i32
    return %c0_i32, %arg1 : i32, i32
  }
  func.func @transform_3(%arg0: i32, %arg1: i32) -> (i32, i32) {
    %c0_i32 = arith.constant 0 : i32
    return %arg0, %arg1 : i32, i32
  }
}

</mosaic_0001>

<llo_original>
// kernel: tpu_custom_call.1
$region0: #{tpu_custom_call.1}
  #allocation0 [shape = 'u32[]', space=smem, size = 0x4, offset = 0x4, fixed_abs, tag = 'smem constant byte address 0x4 - core index']
  #allocation1 [shape = 'u32[72,128]{1,0:T(1,128)}', space=vmem, size = 0x9000, scoped, tag = 'internal scratch']
  %s0 = inlined_call_operand.hbm [shape: f32[8,128], index: 0, kind: input, shape index: {}]
  %s1 = inlined_call_operand.hbm [shape: f32[128,256], index: 1, kind: input, shape index: {}]
  %s2 = inlined_call_operand.hbm [shape: f32[1,256], index: 2, kind: input, shape index: {}]
  %s3 = inlined_call_operand.hbm [shape: f32[8,256], index: 3, kind: output, shape index: {}]
  %s4 = sld [smem:[#allocation0]]
  $region57: #{tpu_custom_call.1} parent=0
    _
  %s6 = ssub.s32 1, %s4
  %s7 = scalar_select 0, %s6, %s4
  $region1: #{tpu_custom_call.1} parent=0
    #allocation2 [shape = 'u8[4096]{0}', space=vmem, size = 0x1000, scoped, tag = 'input window, operand 0, single buffered']
    #allocation3 [shape = 's32[2]{0}', space=sflag, size = 0x8, scoped, tag = 'scoped memory for tpu_custom_call.1']
    #allocation4 [shape = 's32[2]{0}', space=sflag, size = 0x8, scoped, tag = 'scoped memory for tpu_custom_call.1']
    #allocation5 [shape = 'u8[131072]{0}', space=vmem, size = 0x20000, scoped, tag = 'input window, operand 1']
    #allocation6 [shape = 's32[2]{0}', space=sflag, size = 0x8, scoped, tag = 'scoped memory for tpu_custom_call.1']
    #allocation7 [shape = 'u8[1024]{0}', space=vmem, size = 0x400, scoped, tag = 'input window, operand 2']
    #allocation8 [shape = 'u8[8192]{0}', space=vmem, size = 0x2000, scoped, tag = 'output window, operand 0']
    %8 = vsyncpa [#allocation3], 0
    %9 = vsyncpa [#allocation6], 0
    %s10 = scalar_lea.sflag [#allocation6], 1
    %11 = vsyncpa %s10, 0
    %12 = vsyncpa [#allocation4], 0
    %s13 = scalar_lea.sflag [#allocation4], 1
    %14 = vsyncpa %s13, 0
    loop: start=0, step=1, limit=4
    $region2: #{tpu_custom_call.1} parent=1 // loop_pre_header
      _
    $region3: #{tpu_custom_call.1} parent=1 // loop_header
      %s16 = sphi 0, %s20
      %p17 = scmp.ge.s32.totalorder %s16, 4
      %s23 = sphi 0, %s35
      %s24 = sphi 0, %s31
      %s25 = sphi 0, %s23
      %s26 = sphi 0, %s24
      %s27 = sphi 0, %s25
      %s28 = sphi 0, %s26
      %s38 = sphi 0, %s40
      %s41 = sphi 0, %s38
      %s42 = sphi 0, %s41
      %s58 = sphi 0, %s42
      %s64 = sphi 0, %s66
      %s67 = sphi 0, %s64
      %s68 = sphi 0, %s67
      %s84 = sphi 0, %s68
      %s90 = sphi 0, %s92
      %s93 = sphi 0, %s90
      %s94 = sphi 0, %s93
      %s110 = sphi 0, %s94
      %s118 = sphi 0, %s120
      %s121 = sphi 0, %s118
      %s122 = sphi 0, %s121
      %s138 = sphi 0, %s122
    $region4: #{tpu_custom_call.1} parent=1 // loop_header_branch
      %19 = sbr.rel (%p17) target = $region8
    $region5: #{tpu_custom_call.1} parent=1 // loop_body
      %s21 = ssub.s32 %s16, 1
      %s22 = ssub.s32 %s16, 2
      %s29 = sadd.s32 1, %s24
      %p30 = scmp.ge.s32.totalorder %s29, 2
      %s31 = scalar_select %p30, 0, %s29
      %s32 = sadd.s32 1, %s23
      %s33 = scalar_select %p30, %s32, %s23
      %p34 = scmp.ge.s32.totalorder %s33, 1
      %s35 = scalar_select %p34, 0, %s33
      %s36 = ssub.s32 %s23, %s35
      %p37 = scmp.eq.s32.totalorder %s36, 0
      %s39 = sadd.s32 %s38, 1
      %s40 = scalar_select %p37, %s38, %s39
      %p43 = pneg %p37
      %p44 = scmp.eq.s32.totalorder %s16, 1
      %p45 = por %p43, %p44
      %p46 = scmp.ne.s32.totalorder %s38, %s41
      %p47 = scmp.eq.s32.totalorder %s16, 0
      %p48 = por %p46, %p47
      %p49 = scmp.ne.s32.totalorder %s38, %s41
      %p50 = scmp.eq.s32.totalorder %s21, 1
      %p51 = por %p49, %p50
      %p52 = scmp.ne.s32.totalorder %s41, %s42
      %p53 = scmp.eq.s32.totalorder %s21, 0
      %p54 = por %p52, %p53
      %p55 = scmp.ne.s32.totalorder %s41, %s42
      %p56 = scmp.eq.s32.totalorder %s22, 1
      %p57 = por %p55, %p56
      %p59 = scmp.ne.s32.totalorder %s42, %s58
      %p60 = scmp.eq.s32.totalorder %s22, 0
      %p61 = por %p59, %p60
      %s62 = ssub.s32 %s24, %s31
      %p63 = scmp.eq.s32.totalorder %s62, 0
      %s65 = sadd.s32 %s64, 1
      %s66 = scalar_select %p63, %s64, %s65
      %p69 = pneg %p63
      %p70 = scmp.eq.s32.totalorder %s16, 1
      %p71 = por %p69, %p70
      %p72 = scmp.ne.s32.totalorder %s64, %s67
      %p73 = scmp.eq.s32.totalorder %s16, 0
      %p74 = por %p72, %p73
      %p75 = scmp.ne.s32.totalorder %s64, %s67
      %p76 = scmp.eq.s32.totalorder %s21, 1
      %p77 = por %p75, %p76
      %p78 = scmp.ne.s32.totalorder %s67, %s68
      %p79 = scmp.eq.s32.totalorder %s21, 0
      %p80 = por %p78, %p79
      %p81 = scmp.ne.s32.totalorder %s67, %s68
      %p82 = scmp.eq.s32.totalorder %s22, 1
      %p83 = por %p81, %p82
      %p85 = scmp.ne.s32.totalorder %s68, %s84
      %p86 = scmp.eq.s32.totalorder %s22, 0
      %p87 = por %p85, %p86
      %s88 = ssub.s32 %s24, %s31
      %p89 = scmp.eq.s32.totalorder %s88, 0
      %s91 = sadd.s32 %s90, 1
      %s92 = scalar_select %p89, %s90, %s91
      %p95 = pneg %p89
      %p96 = scmp.eq.s32.totalorder %s16, 1
      %p97 = por %p95, %p96
      %p98 = scmp.ne.s32.totalorder %s90, %s93
      %p99 = scmp.eq.s32.totalorder %s16, 0
      %p100 = por %p98, %p99
      %p101 = scmp.ne.s32.totalorder %s90, %s93
      %p102 = scmp.eq.s32.totalorder %s21, 1
      %p103 = por %p101, %p102
      %p104 = scmp.ne.s32.totalorder %s93, %s94
      %p105 = scmp.eq.s32.totalorder %s21, 0
      %p106 = por %p104, %p105
      %p107 = scmp.ne.s32.totalorder %s93, %s94
      %p108 = scmp.eq.s32.totalorder %s22, 1
      %p109 = por %p107, %p108
      %p111 = scmp.ne.s32.totalorder %s94, %s110
      %p112 = scmp.eq.s32.totalorder %s22, 0
      %p113 = por %p111, %p112
      %s114 = ssub.s32 %s23, %s35
      %s115 = ssub.s32 %s24, %s31
      %s116 = sor.u32 %s114, %s115
      %p117 = scmp.eq.s32.totalorder %s116, 0
      %s119 = sadd.s32 %s118, 1
      %s120 = scalar_select %p117, %s118, %s119
      %p123 = pneg %p117
      %p124 = scmp.eq.s32.totalorder %s16, 1
      %p125 = por %p123, %p124
      %p126 = scmp.ne.s32.totalorder %s118, %s121
      %p127 = scmp.eq.s32.totalorder %s16, 0
      %p128 = por %p126, %p127
      %p129 = scmp.ne.s32.totalorder %s118, %s121
      %p130 = scmp.eq.s32.totalorder %s21, 1
      %p131 = por %p129, %p130
      %p132 = scmp.ne.s32.totalorder %s121, %s122
      %p133 = scmp.eq.s32.totalorder %s21, 0
      %p134 = por %p132, %p133
      %p135 = scmp.ne.s32.totalorder %s121, %s122
      %p136 = scmp.eq.s32.totalorder %s22, 1
      %p137 = por %p135, %p136
      %p139 = scmp.ne.s32.totalorder %s122, %s138
      %p140 = scmp.eq.s32.totalorder %s22, 0
      %p141 = por %p139, %p140
      %p142 = scmp.le.s32.totalorder 1, %s16
      %p143 = scmp.lt.s32.totalorder %s16, 3
      %p144 = pnand %p142, %p143
      %p145 = pneg %p144
      // Predicated region
      $region9: #{tpu_custom_call.1} parent=5 // pred_check
        _
      $region10: #{tpu_custom_call.1} parent=5 // pred_check_branch
        %147 = sbr.rel (%p144) target = $region12
      $region11: #{tpu_custom_call.1} parent=5 // pred_region
        %s148 = ssub.s32 %s16, 1
        // Predicated region
        $region13: #{tpu_custom_call.1} parent=11 // pred_check
          %p149 = pneg %p54
        $region14: #{tpu_custom_call.1} parent=11 // pred_check_branch
          %151 = sbr.rel (%p149) target = $region16
        $region15: #{tpu_custom_call.1} parent=11 // pred_region
          %153 = vsyncadd [#allocation3], 0
          %s154 = smul.addr %s25, 8
          %s155 = scalar_lea.hbm %s0, %s154
          %s157 = sshll.u32 %s155, 4
          %s158 = int_to_ptr.hbm [resolvable:$true] %s157
          %s159 = sshll.u32 [#allocation2], 4
          %s160 = int_to_ptr.vmem [resolvable:$true] %s159
          %162 = dma.hbm_to_vmem [thread:$0]  %s158, 128, %s160, [#allocation3]
        $region16: #{tpu_custom_call.1} parent=11 // pred_fallthru
          _
      $region12: #{tpu_custom_call.1} parent=5 // pred_fallthru
        _
      %p163 = scmp.lt.s32.totalorder %s16, 2
      // Predicated region
      $region17: #{tpu_custom_call.1} parent=5 // pred_check
        %p164 = pneg %p163
      $region18: #{tpu_custom_call.1} parent=5 // pred_check_branch
        %166 = sbr.rel (%p164) target = $region20
      $region19: #{tpu_custom_call.1} parent=5 // pred_region
        // Predicated region
        $region21: #{tpu_custom_call.1} parent=19 // pred_check
          %p167 = pneg %p74
        $region22: #{tpu_custom_call.1} parent=19 // pred_check_branch
          %169 = sbr.rel (%p167) target = $region24
        $region23: #{tpu_custom_call.1} parent=19 // pred_region
          %s170 = sand.u32 %s16, 1
          %s171 = scalar_lea.sflag [#allocation6], %s170
          %s172 = sand.u32 %s64, 1
          %s173 = smul.addr %s172, 128
          %s174 = scalar_lea.vmem [#allocation5], %s173
          %176 = vsyncadd %s171, 0
          %s177 = smul.addr %s24, 8
          %s178 = scalar_lea.hbm %s1, %s177
          %s179 = sshll.u32 %s178, 4
          %s180 = int_to_ptr.hbm [resolvable:$true] %s179
          %s181 = sshll.u32 %s174, 4
          %s182 = int_to_ptr.vmem [resolvable:$true] %s181
          %187 = dma.hbm_to_vmem [thread:$0]  %s180, 2048, %s182, %s171, 256, 128, 8
        $region24: #{tpu_custom_call.1} parent=19 // pred_fallthru
          _
        // Predicated region
        $region25: #{tpu_custom_call.1} parent=19 // pred_check
          %p188 = pneg %p100
        $region26: #{tpu_custom_call.1} parent=19 // pred_check_branch
          %190 = sbr.rel (%p188) target = $region28
        $region27: #{tpu_custom_call.1} parent=19 // pred_region
          %s191 = sand.u32 %s16, 1
          %s192 = scalar_lea.sflag [#allocation6], %s191
          %s193 = sand.u32 %s90, 1
          %s194 = scalar_lea.vmem [#allocation7], %s193
          %196 = vsyncadd %s192, 0
          %s197 = scalar_lea.hbm %s2, %s24
          %s199 = sshll.u32 %s197, 4
          %s200 = int_to_ptr.hbm [resolvable:$true] %s199
          %s201 = sshll.u32 %s194, 4
          %s202 = int_to_ptr.vmem [resolvable:$true] %s201
          %204 = dma.hbm_to_vmem [thread:$0]  %s200, 16, %s202, %s192
        $region28: #{tpu_custom_call.1} parent=19 // pred_fallthru
          _
      $region20: #{tpu_custom_call.1} parent=5 // pred_fallthru
        _
      %p205 = scmp.le.s32.totalorder 1, %s16
      %p206 = scmp.lt.s32.totalorder %s16, 3
      %p207 = pnand %p205, %p206
      %p208 = pneg %p207
      // Predicated region
      $region29: #{tpu_custom_call.1} parent=5 // pred_check
        _
      $region30: #{tpu_custom_call.1} parent=5 // pred_check_branch
        %210 = sbr.rel (%p207) target = $region32
      $region31: #{tpu_custom_call.1} parent=5 // pred_region
        %s211 = ssub.s32 %s16, 1
        // Predicated region
        $region33: #{tpu_custom_call.1} parent=31 // pred_check
          %p212 = pneg %p54
        $region34: #{tpu_custom_call.1} parent=31 // pred_check_branch
          %214 = sbr.rel (%p212) target = $region36
        $region35: #{tpu_custom_call.1} parent=31 // pred_region
          %216 = dma.done [#allocation3], 128
        $region36: #{tpu_custom_call.1} parent=31 // pred_fallthru
          _
        %s217 = sand.u32 %s21, 1
        %s218 = scalar_lea.sflag [#allocation6], %s217
        %s219 = sand.u32 %s67, 1
        %s220 = smul.addr %s219, 128
        %s221 = scalar_lea.vmem [#allocation5], %s220
        // Predicated region
        $region37: #{tpu_custom_call.1} parent=31 // pred_check
          %p222 = pneg %p80
        $region38: #{tpu_custom_call.1} parent=31 // pred_check_branch
          %224 = sbr.rel (%p222) target = $region40
        $region39: #{tpu_custom_call.1} parent=31 // pred_region
          %226 = dma.done %s218, 2048
        $region40: #{tpu_custom_call.1} parent=31 // pred_fallthru
          _
        %s227 = sand.u32 %s21, 1
        %s228 = scalar_lea.sflag [#allocation6], %s227
        %s229 = sand.u32 %s93, 1
        %s230 = scalar_lea.vmem [#allocation7], %s229
        // Predicated region
        $region41: #{tpu_custom_call.1} parent=31 // pred_check
          %p231 = pneg %p106
        $region42: #{tpu_custom_call.1} parent=31 // pred_check_branch
          %233 = sbr.rel (%p231) target = $region44
        $region43: #{tpu_custom_call.1} parent=31 // pred_region
          %235 = dma.done %s228, 16
        $region44: #{tpu_custom_call.1} parent=31 // pred_fallthru
          _
        %p236 = pneg %p54
        %p237 = pneg %p51
        %s238 = sand.u32 %s21, 1
        %s239 = scalar_lea.sflag [#allocation6], %s238
        %s240 = sand.u32 %s67, 1
        %s241 = smul.addr %s240, 128
        %s242 = scalar_lea.vmem [#allocation5], %s241
        %p243 = pneg %p80
        %p244 = pneg %p77
        %s245 = sand.u32 %s21, 1
        %s246 = scalar_lea.sflag [#allocation6], %s245
        %s247 = sand.u32 %s93, 1
        %s248 = scalar_lea.vmem [#allocation7], %s247
        %p249 = pneg %p106
        %p250 = pneg %p103
        %p251 = pneg %p134
        %p252 = pneg %p131
        %s253 = sand.u32 %s121, 1
        %s254 = scalar_lea.sflag [#allocation4], %s253
        %s255 = sand.u32 %s121, 1
        %s256 = smul.addr %s255, 8
        %s257 = scalar_lea.vmem [#allocation8], %s256
        %v258 = vld [vmem:[#allocation2] sm:$0xff]
        %v259 = vld [vmem:[%s221] sm:$0xff]
        %v260 = vld [vmem:[%s221 + $0x8] sm:$0xff]
        %v261 = vld [vmem:[%s221 + $0x10] sm:$0xff]
        %v262 = vld [vmem:[%s221 + $0x18] sm:$0xff]
        %v263 = vld [vmem:[%s221 + $0x20] sm:$0xff]
        %v264 = vld [vmem:[%s221 + $0x28] sm:$0xff]
        %v265 = vld [vmem:[%s221 + $0x30] sm:$0xff]
        %v266 = vld [vmem:[%s221 + $0x38] sm:$0xff]
        %v267 = vld [vmem:[%s221 + $0x40] sm:$0xff]
        %v268 = vld [vmem:[%s221 + $0x48] sm:$0xff]
        %v269 = vld [vmem:[%s221 + $0x50] sm:$0xff]
        %v270 = vld [vmem:[%s221 + $0x58] sm:$0xff]
        %v271 = vld [vmem:[%s221 + $0x60] sm:$0xff]
        %v272 = vld [vmem:[%s221 + $0x68] sm:$0xff]
        %v273 = vld [vmem:[%s221 + $0x70] sm:$0xff]
        %v274 = vld [vmem:[%s221 + $0x78] sm:$0xff]
        %v275 = vld [vmem:[%s230] sm:$0x1]
        %v277 = vperm.slane %v275, 0
        %279 = vmatpush.msra.mxu0 %v274
        %280 = vmatpush.msra.mxu0 %v273
        %281 = vmatpush.msra.mxu0 %v272
        %282 = vmatpush.msra.mxu0 %v271
        %283 = vmatpush.msra.mxu0 %v270
        %284 = vmatpush.msra.mxu0 %v269
        %285 = vmatpush.msra.mxu0 %v268
        %286 = vmatpush.msra.mxu0 %v267
        %287 = vmatpush.msra.mxu0 %v266
        %288 = vmatpush.msra.mxu0 %v265
        %289 = vmatpush.msra.mxu0 %v264
        %290 = vmatpush.msra.mxu0 %v263
        %291 = vmatpush.msra.mxu0 %v262
        %292 = vmatpush.msra.mxu0 %v261
        %293 = vmatpush.msra.mxu0 %v260
        %294 = vmatpush.msra.mxu0 %v259
        %295 = vmatmul.f32.gmra.mxu0 %v258
        %v296 = vpop.f32.mrf.mxu0
        %v297 = vadd.f32 %v277, %v296
        %298 = vdwg.mxu0
        %299 = vst [vmem:[%s257] sm:$0xff] %v297
        %s300 = sand.u32 %s121, 1
        %s301 = scalar_lea.sflag [#allocation4], %s300
        %s302 = sand.u32 %s121, 1
        %s303 = smul.addr %s302, 8
        %s304 = scalar_lea.vmem [#allocation8], %s303
        // Predicated region
        $region45: #{tpu_custom_call.1} parent=31 // pred_check
          %p305 = pneg %p131
        $region46: #{tpu_custom_call.1} parent=31 // pred_check_branch
          %307 = sbr.rel (%p305) target = $region48
        $region47: #{tpu_custom_call.1} parent=31 // pred_region
          %309 = vsyncadd %s301, 0
          %s310 = smul.addr %s25, 2
          %s311 = sadd.s32 %s26, %s310
          %s312 = smul.addr %s311, 8
          %s313 = scalar_lea.hbm %s3, %s312
          %s315 = sshll.u32 %s304, 4
          %s316 = int_to_ptr.vmem [resolvable:$true] %s315
          %s317 = sshll.u32 %s313, 4
          %s318 = int_to_ptr.hbm [resolvable:$true] %s317
          %320 = dma.vmem_to_hbm [thread:$0]  %s316, 128, %s318, %s301
        $region48: #{tpu_custom_call.1} parent=31 // pred_fallthru
          _
      $region32: #{tpu_custom_call.1} parent=5 // pred_fallthru
        _
      %p321 = scmp.le.s32.totalorder 2, %s16
      // Predicated region
      $region49: #{tpu_custom_call.1} parent=5 // pred_check
        %p322 = pneg %p321
      $region50: #{tpu_custom_call.1} parent=5 // pred_check_branch
        %324 = sbr.rel (%p322) target = $region52
      $region51: #{tpu_custom_call.1} parent=5 // pred_region
        %s325 = ssub.s32 %s16, 2
        // Predicated region
        $region53: #{tpu_custom_call.1} parent=51 // pred_check
          %p326 = pneg %p137
        $region54: #{tpu_custom_call.1} parent=51 // pred_check_branch
          %328 = sbr.rel (%p326) target = $region56
        $region55: #{tpu_custom_call.1} parent=51 // pred_region
          %s329 = sand.u32 %s122, 1
          %s330 = scalar_lea.sflag [#allocation4], %s329
          %s331 = sand.u32 %s122, 1
          %s332 = smul.addr %s331, 8
          %s333 = scalar_lea.vmem [#allocation8], %s332
          %335 = dma.done %s330, 128
        $region56: #{tpu_custom_call.1} parent=51 // pred_fallthru
          _
      $region52: #{tpu_custom_call.1} parent=5 // pred_fallthru
        _
    $region6: #{tpu_custom_call.1} parent=1 // loop_footer
      %s20 = sadd.s32 1, %s16
    $region7: #{tpu_custom_call.1} parent=1 // loop_footer_branch
      %15 = sbr.rel target = $region3
    $region8: #{tpu_custom_call.1} parent=1 // loop_exit
      _
    %336 = vsyncpa [#allocation3], 1
    %s337 = scalar_lea.sflag [#allocation3], 1
    %338 = vsyncpa %s337, 1
    %339 = vsyncpa [#allocation6], 1
    %s340 = scalar_lea.sflag [#allocation6], 1
    %341 = vsyncpa %s340, 1
    %342 = vsyncpa [#allocation4], 1
    %s343 = scalar_lea.sflag [#allocation4], 1
    %344 = vsyncpa %s343, 1

</llo_original>
